<compile_context>
chip_gen: v5e
topology: v5e:2x2
jax: 0.10.0
libtpu: 0.0.40
codegen_flags: <defaults>
</compile_context>

<pallas_src>
import functools

import jax
import jax.numpy as jnp
from jax import lax
from jax.experimental import pallas as pl
from jax.experimental.pallas import tpu as pltpu

_MIB = 1024 * 1024


def _joint_encoder_kernel(page_ref, ctx_ref, w_ref, b_ref, o_ref, acc_ref, *,
                          inv_s, seq_len, seq_tile, mask_seq):
    """One grid step of the fused joint encoder.

    grid = (encoder, batch_block, seq_block) with the seq (reduction) axis last.
    page_ref/ctx_ref: [tb, ts, D] f32   w_ref: [D, H] f32   b_ref: [1, H] f32
    o_ref: [tb, H] f32                  acc_ref: [tb, D] f32 scratch (seq-sum)
    """
    e = pl.program_id(0)
    s_idx = pl.program_id(2)

    @pl.when(s_idx == 0)
    def _init():
        acc_ref[...] = jnp.zeros_like(acc_ref)

    def _accumulate(x_ref):
        x = x_ref[...]
        if mask_seq:
            # Ragged last seq tile: zero positions >= seq_len (cheap VPU select;
            # the kernel is HBM-bound, so this is free).
            pos = s_idx * seq_tile + lax.broadcasted_iota(
                jnp.int32, (1, seq_tile, 1), 1)
            x = jnp.where(pos < seq_len, x, 0.0)
        # Accumulate straight into fp32 (no materialized fp32 copy of the tile).
        acc_ref[...] += jnp.sum(x, axis=1, dtype=jnp.float32)

    # Only the active encoder's tile is touched; the inactive input's block
    # index is frozen by its index_map so it is never re-DMA'd.
    @pl.when(e == 0)
    def _desc():
        _accumulate(page_ref)

    @pl.when(e == 1)
    def _mention():
        _accumulate(ctx_ref)

    @pl.when(s_idx == pl.num_programs(2) - 1)
    def _finish():
        # Fold 1/S into the pooled [tb, D] tile (S x cheaper than scaling the
        # full stream), then one MXU matmul + bias + ReLU per (encoder, batch).
        pooled = acc_ref[...] * inv_s
        y = jnp.dot(pooled, w_ref[...], preferred_element_type=jnp.float32)
        y = y + b_ref[...]
        o_ref[...] = jnp.maximum(y, 0.0).astype(o_ref.dtype)


def _vmem_capacity_bytes():
    try:
        cap = getattr(pltpu.get_tpu_info(), "vmem_capacity_bytes", None)
        if cap:
            return int(cap)
    except Exception:
        pass
    return 64 * _MIB          # conservative fallback == v7x per-core VMEM


def _maybe_buffered_spec(block_shape, index_map, buffer_count):
    """BlockSpec with an explicit buffer count; falls back to default buffering
    if this jax build does not expose pipeline_mode / pl.Buffered."""
    try:
        return pl.BlockSpec(block_shape, index_map,
                            pipeline_mode=pl.Buffered(buffer_count=buffer_count))
    except Exception:
        return pl.BlockSpec(block_shape, index_map)


@jax.jit
def joint_encode(page, ctx, desc_w, desc_b, men_w, men_b):
    """Fused Pallas encoders: returns (desc_embeds, mention_context_embeds)."""
    B, S, D = page.shape
    H = desc_w.shape[1]
    assert ctx.shape == page.shape

    # ---- generation-aware VMEM budget ---------------------------------------
    cap = _vmem_capacity_bytes()
    if cap <= 64 * _MIB:                        # v7x (64 MiB/TC): keep headroom
        vmem_limit = cap - 8 * _MIB
    else:                                       # v5e / v6e (128 MiB physical)
        vmem_limit = min(100 * _MIB, cap - 28 * _MIB)

    # ---- tile selection (no input padding; edge blocks handled by in-kernel
    # seq masking and by discarding out-of-range batch rows) ------------------
    x_elem = page.dtype.itemsize
    w_resident = D * H * 4 + H * 4              # single-buffered weights + bias

    def tile_bytes(tb_, ts_):
        # 2 streamed inputs x double buffer + 2 output buffers + acc scratch.
        return 4 * tb_ * ts_ * D * x_elem + 2 * tb_ * H * 4 + tb_ * D * 4

    budget = max(int(vmem_limit * 0.85) - 2 * w_resident, 4 * _MIB)
    tb = B if B <= 256 else 256                 # == B (full dim) or multiple of 8
    ts = S if S <= 2048 else 2048               # == S (full dim) or multiple of 8
    while tile_bytes(tb, ts) > budget and ts > 8:
        ts = max(8, (ts // 2) // 8 * 8)
    while tile_bytes(tb, ts) > budget and tb > 8:
        tb = max(8, (tb // 2) // 8 * 8)
    # TODO(synk): for extreme D where even a (8, 8, D) tile exceeds the budget,
    # add a D-chunked grid axis with partial matmuls into a [tb, H] scratch.

    nb = (B + tb - 1) // tb
    ns = (S + ts - 1) // ts
    mask_seq = (S % ts) != 0

    # Small per-encoder params stacked on a leading axis (negligible vs. stream).
    ws = jnp.stack([desc_w, men_w], axis=0).astype(jnp.float32)            # [2,D,H]
    bs = jnp.stack([desc_b.reshape(1, -1), men_b.reshape(1, -1)],
                   axis=0).astype(jnp.float32)                             # [2,1,H]

    # Active encoder streams its real blocks; the inactive input's block index
    # is frozen (to the block it already holds / needs next), so every input
    # element is DMA'd from HBM exactly once across the whole kernel.
    def page_map(e, b, s):
        return (b * (1 - e) + (nb - 1) * e, s * (1 - e) + (ns - 1) * e, 0)

    def ctx_map(e, b, s):
        return (b * e, s * e, 0)

    in_specs = [
        pl.BlockSpec((tb, ts, D), page_map),
        pl.BlockSpec((tb, ts, D), ctx_map),
        # Weights / bias only change at the encoder transition: single-buffer
        # them (halves resident weight VMEM; one exposed DMA per encoder).
        _maybe_buffered_spec((None, D, H), lambda e, b, s: (e, 0, 0), 1),
        _maybe_buffered_spec((None, 1, H), lambda e, b, s: (e, 0, 0), 1),
    ]
    out_spec = pl.BlockSpec((None, tb, H), lambda e, b, s: (e, b, 0))

    cost = pl.CostEstimate(
        flops=int(2 * B * S * D + 4 * B * D * H + 4 * B * H),
        transcendentals=0,
        bytes_accessed=int(2 * B * S * D * x_elem + ws.size * 4 + bs.size * 4
                           + 2 * B * H * 4),
    )

    out = pl.pallas_call(
        functools.partial(_joint_encoder_kernel, inv_s=1.0 / S, seq_len=S,
                          seq_tile=ts, mask_seq=mask_seq),
        out_shape=jax.ShapeDtypeStruct((2, B, H), jnp.float32),
        grid_spec=pltpu.PrefetchScalarGridSpec(
            num_scalar_prefetch=0,
            grid=(2, nb, ns),                   # (encoder, batch, seq-reduction)
            in_specs=in_specs,
            out_specs=out_spec,
            scratch_shapes=[pltpu.VMEM((tb, D), jnp.float32)],
        ),
        compiler_params=pltpu.CompilerParams(
            dimension_semantics=("parallel", "parallel", "arbitrary"),
            vmem_limit_bytes=int(vmem_limit),
        ),
        cost_estimate=cost,
    )(page, ctx, ws, bs)

    desc_embeds = out[0]
    mention_context_embeds = out[1]
    return desc_embeds, mention_context_embeds


class JointEncoder:
    """JAX/Pallas port of the PyTorch JointEncoder wrapper (fused kernel)."""

    def __init__(self, desc_params, mention_params):
        self.desc_w, self.desc_b = desc_params
        self.men_w, self.men_b = mention_params

    def __call__(self, data):
        embedded_mention_context = data[0]   # consumed by mention_context_encoder
        embedded_page_contents = data[1]     # consumed by desc_encoder
        return joint_encode(embedded_page_contents, embedded_mention_context,
                            self.desc_w, self.desc_b, self.men_w, self.men_b)


def _init_linear(key, d_in, d_out):
    kw, kb = jax.random.split(key)
    bound = 1.0 / (d_in ** 0.5)
    w = jax.random.uniform(kw, (d_in, d_out), jnp.float32, -bound, bound)
    b = jax.random.uniform(kb, (1, d_out), jnp.float32, -bound, bound)
    return w, b


if __name__ == "__main__":
    B, S, D, H = 2, 8, 32, 32

    key = jax.random.PRNGKey(0)
    k_ctx, k_page, k_desc, k_men = jax.random.split(key, 4)

    embedded_mention_context = jax.random.normal(k_ctx, (B, S, D), jnp.float32)
    embedded_page_contents = jax.random.normal(k_page, (B, S, D), jnp.float32)
    data = (embedded_mention_context, embedded_page_contents)

    desc_params = _init_linear(k_desc, D, H)
    mention_params = _init_linear(k_men, D, H)

    model = JointEncoder(desc_params, mention_params)
    desc_embeds, mention_context_embeds = model(data)
    jax.block_until_ready((desc_embeds, mention_context_embeds))

    # Plain-JAX fp32 reference (kernel now streams fp32, so numerics are close;
    # small tolerance covers MXU default-precision matmul differences).
    def ref(x, w, b):
        pooled = jnp.mean(x, axis=1)
        return jnp.maximum(jnp.dot(pooled, w) + b, 0.0)

    assert desc_embeds.shape == (B, H)
    assert mention_context_embeds.shape == (B, H)
    assert jnp.allclose(desc_embeds, ref(embedded_page_contents, *desc_params),
                        atol=2e-3, rtol=2e-3)
    assert jnp.allclose(mention_context_embeds,
                        ref(embedded_mention_context, *mention_params),
                        atol=2e-3, rtol=2e-3)

    print("KERNEL_OK")
</pallas_src>

<mosaic_0001>
module attributes {stable_mosaic.version = 11 : i64} {
  func.func @_joint_encoder_kernel(%arg0: i32, %arg1: i32, %arg2: i32, %arg3: memref<2x8x32xf32, #tpu.memory_space<vmem>>, %arg4: memref<2x8x32xf32, #tpu.memory_space<vmem>>, %arg5: memref<1x32x32xf32, #tpu.memory_space<vmem>>, %arg6: memref<1x1x32xf32, #tpu.memory_space<vmem>>, %arg7: memref<1x2x32xf32, #tpu.memory_space<vmem>>, %arg8: memref<2x32xf32, #tpu.memory_space<vmem>>) attributes {dimension_semantics = [#tpu.dimension_semantics<parallel>, #tpu.dimension_semantics<parallel>, #tpu.dimension_semantics<arbitrary>], iteration_bounds = array<i64: 2, 1, 1>, scalar_prefetch = 0 : i64, scratch_operands = 1 : i64, tpu.core_type = #tpu.core_type<tc>, window_params = [{transform_indices = @transform_0, window_bounds = array<i64: 2, 8, 32>}, {transform_indices = @transform_1, window_bounds = array<i64: 2, 8, 32>}, {pipeline_mode = #tpu.pipeline_mode<synchronous>, transform_indices = @transform_2, window_bounds = array<i64: 1, 32, 32>}, {pipeline_mode = #tpu.pipeline_mode<synchronous>, transform_indices = @transform_3, window_bounds = array<i64: 1, 1, 32>}, {transform_indices = @transform_4, window_bounds = array<i64: 1, 2, 32>}]} {
    %c0_i32 = arith.constant 0 : i32
    %0 = arith.cmpi eq, %arg2, %c0_i32 : i32
    %1 = arith.extui %0 : i1 to i32
    %c0_i32_0 = arith.constant 0 : i32
    %2 = arith.cmpi ne, %1, %c0_i32_0 : i32
    scf.if %2 {
      %cst = arith.constant 0.000000e+00 : f32
      %12 = vector.broadcast %cst : f32 to vector<2x32xf32>
      %c0 = arith.constant 0 : index
      %c0_6 = arith.constant 0 : index
      %13 = vector.load %arg8[%c0, %c0_6] : memref<2x32xf32, #tpu.memory_space<vmem>>, vector<2x32xf32>
      tpu.vector_store %arg8[%c0, %c0_6], %12 {strides = array<i32>} : memref<2x32xf32, #tpu.memory_space<vmem>>, vector<2x32xf32>,
    } else {
    }
    %c0_i32_1 = arith.constant 0 : i32
    %3 = arith.cmpi eq, %arg0, %c0_i32_1 : i32
    %4 = arith.extui %3 : i1 to i32
    %c0_i32_2 = arith.constant 0 : i32
    %5 = arith.cmpi ne, %4, %c0_i32_2 : i32
    scf.if %5 {
      %c0 = arith.constant 0 : index
      %c0_6 = arith.constant 0 : index
      %c0_7 = arith.constant 0 : index
      %12 = vector.load %arg3[%c0, %c0_6, %c0_7] : memref<2x8x32xf32, #tpu.memory_space<vmem>>, vector<2x8x32xf32>
      %c0_8 = arith.constant 0 : index
      %c0_9 = arith.constant 0 : index
      %13 = vector.load %arg8[%c0_8, %c0_9] : memref<2x32xf32, #tpu.memory_space<vmem>>, vector<2x32xf32>
      %cst = arith.constant dense<0.000000e+00> : vector<2x32xf32>
      %14 = vector.multi_reduction <add>, %12, %cst [1] : vector<2x8x32xf32> to vector<2x32xf32>
      %15 = arith.addf %13, %14 : vector<2x32xf32>
      %c0_10 = arith.constant 0 : index
      %c0_11 = arith.constant 0 : index
      %16 = vector.load %arg8[%c0_10, %c0_11] : memref<2x32xf32, #tpu.memory_space<vmem>>, vector<2x32xf32>
      tpu.vector_store %arg8[%c0_10, %c0_11], %15 {strides = array<i32>} : memref<2x32xf32, #tpu.memory_space<vmem>>, vector<2x32xf32>,
    } else {
    }
    %c1_i32 = arith.constant 1 : i32
    %6 = arith.cmpi eq, %arg0, %c1_i32 : i32
    %7 = arith.extui %6 : i1 to i32
    %c0_i32_3 = arith.constant 0 : i32
    %8 = arith.cmpi ne, %7, %c0_i32_3 : i32
    scf.if %8 {
      %c0 = arith.constant 0 : index
      %c0_6 = arith.constant 0 : index
      %c0_7 = arith.constant 0 : index
      %12 = vector.load %arg4[%c0, %c0_6, %c0_7] : memref<2x8x32xf32, #tpu.memory_space<vmem>>, vector<2x8x32xf32>
      %c0_8 = arith.constant 0 : index
      %c0_9 = arith.constant 0 : index
      %13 = vector.load %arg8[%c0_8, %c0_9] : memref<2x32xf32, #tpu.memory_space<vmem>>, vector<2x32xf32>
      %cst = arith.constant dense<0.000000e+00> : vector<2x32xf32>
      %14 = vector.multi_reduction <add>, %12, %cst [1] : vector<2x8x32xf32> to vector<2x32xf32>
      %15 = arith.addf %13, %14 : vector<2x32xf32>
      %c0_10 = arith.constant 0 : index
      %c0_11 = arith.constant 0 : index
      %16 = vector.load %arg8[%c0_10, %c0_11] : memref<2x32xf32, #tpu.memory_space<vmem>>, vector<2x32xf32>
      tpu.vector_store %arg8[%c0_10, %c0_11], %15 {strides = array<i32>} : memref<2x32xf32, #tpu.memory_space<vmem>>, vector<2x32xf32>,
    } else {
    }
    %c0_i32_4 = arith.constant 0 : i32
    %9 = arith.cmpi eq, %arg2, %c0_i32_4 : i32
    %10 = arith.extui %9 : i1 to i32
    %c0_i32_5 = arith.constant 0 : i32
    %11 = arith.cmpi ne, %10, %c0_i32_5 : i32
    scf.if %11 {
      %c0 = arith.constant 0 : index
      %c0_6 = arith.constant 0 : index
      %12 = vector.load %arg8[%c0, %c0_6] : memref<2x32xf32, #tpu.memory_space<vmem>>, vector<2x32xf32>
      %cst = arith.constant 1.250000e-01 : f32
      %13 = vector.broadcast %cst : f32 to vector<2x32xf32>
      %14 = arith.mulf %12, %13 : vector<2x32xf32>
      %c0_7 = arith.constant 0 : index
      %c0_8 = arith.constant 0 : index
      %c0_9 = arith.constant 0 : index
      %15 = vector.load %arg5[%c0_7, %c0_8, %c0_9] : memref<1x32x32xf32, #tpu.memory_space<vmem>>, vector<1x32x32xf32>
      %16 = vector.shape_cast %15 : vector<1x32x32xf32> to vector<32x32xf32>
      %cst_10 = arith.constant dense<0.000000e+00> : vector<2x32xf32>
      %17 = tpu.matmul %14, %16, %cst_10 {dimension_numbers = #tpu.dot_dimension_numbers<[1], [0], [0], [1], [0, 0, 1, 1], [], []>} : vector<2x32xf32>, vector<32x32xf32>, vector<2x32xf32> -> vector<2x32xf32>
      %c0_11 = arith.constant 0 : index
      %c0_12 = arith.constant 0 : index
      %c0_13 = arith.constant 0 : index
      %18 = vector.load %arg6[%c0_11, %c0_12, %c0_13] : memref<1x1x32xf32, #tpu.memory_space<vmem>>, vector<1x1x32xf32>
      %19 = vector.shape_cast %18 : vector<1x1x32xf32> to vector<1x32xf32>
      %20 = vector.broadcast %19 : vector<1x32xf32> to vector<2x32xf32>
      %21 = arith.addf %17, %20 : vector<2x32xf32>
      %cst_14 = arith.constant 0.000000e+00 : f32
      %22 = vector.broadcast %cst_14 : f32 to vector<2x32xf32>
      %23 = arith.maximumf %21, %22 : vector<2x32xf32>
      %c0_15 = arith.constant 0 : index
      %c0_16 = arith.constant 0 : index
      %c0_17 = arith.constant 0 : index
      %24 = vector.load %arg7[%c0_15, %c0_16, %c0_17] : memref<1x2x32xf32, #tpu.memory_space<vmem>>, vector<1x2x32xf32>
      %25 = vector.shape_cast %24 : vector<1x2x32xf32> to vector<2x32xf32>
      %26 = vector.shape_cast %23 : vector<2x32xf32> to vector<1x2x32xf32>
      tpu.vector_store %arg7[%c0_15, %c0_16, %c0_17], %26 {strides = array<i32>} : memref<1x2x32xf32, #tpu.memory_space<vmem>>, vector<1x2x32xf32>,
    } else {
    }
    return
  }
  func.func @transform_0(%arg0: i32, %arg1: i32, %arg2: i32) -> (i32, i32, i32) {
    %c1_i32 = arith.constant 1 : i32
    %0 = arith.subi %c1_i32, %arg0 : i32
    %1 = arith.muli %arg1, %0 : i32
    %c0_i32 = arith.constant 0 : i32
    %2 = arith.muli %c0_i32, %arg0 : i32
    %3 = arith.addi %1, %2 : i32
    %c1_i32_0 = arith.constant 1 : i32
    %4 = arith.subi %c1_i32_0, %arg0 : i32
    %5 = arith.muli %arg2, %4 : i32
    %c0_i32_1 = arith.constant 0 : i32
    %6 = arith.muli %c0_i32_1, %arg0 : i32
    %7 = arith.addi %5, %6 : i32
    %c0_i32_2 = arith.constant 0 : i32
    %c0_i32_3 = arith.constant 0 : i32
    return %3, %7, %c0_i32_2 : i32, i32, i32
  }
  func.func @transform_1(%arg0: i32, %arg1: i32, %arg2: i32) -> (i32, i32, i32) {
    %0 = arith.muli %arg1, %arg0 : i32
    %1 = arith.muli %arg2, %arg0 : i32
    %c0_i32 = arith.constant 0 : i32
    %c0_i32_0 = arith.constant 0 : i32
    return %0, %1, %c0_i32 : i32, i32, i32
  }
  func.func @transform_2(%arg0: i32, %arg1: i32, %arg2: i32) -> (i32, i32, i32) {
    %c0_i32 = arith.constant 0 : i32
    %c0_i32_0 = arith.constant 0 : i32
    %c0_i32_1 = arith.constant 0 : i32
    return %arg0, %c0_i32, %c0_i32_0 : i32, i32, i32
  }
  func.func @transform_3(%arg0: i32, %arg1: i32, %arg2: i32) -> (i32, i32, i32) {
    %c0_i32 = arith.constant 0 : i32
    %c0_i32_0 = arith.constant 0 : i32
    %c0_i32_1 = arith.constant 0 : i32
    return %arg0, %c0_i32, %c0_i32_0 : i32, i32, i32
  }
  func.func @transform_4(%arg0: i32, %arg1: i32, %arg2: i32) -> (i32, i32, i32) {
    %c0_i32 = arith.constant 0 : i32
    %c0_i32_0 = arith.constant 0 : i32
    return %arg0, %arg1, %c0_i32 : i32, i32, i32
  }
}

</mosaic_0001>

<llo_original>
// kernel: joint_encode.1
$region0: #{joint_encode.1}
  #allocation0 [shape = 'u32[]', space=smem, size = 0x4, offset = 0x4, fixed_abs, tag = 'smem constant byte address 0x4 - core index']
  #allocation1 [shape = 'u32[72,128]{1,0:T(1,128)}', space=vmem, size = 0x9000, scoped, tag = 'internal scratch']
  #allocation2 [shape = 'f32[2,32]{1,0:T(2,128)}', space=vmem, size = 0x400, scoped, tag = 'scratch operand']
  %s0 = inlined_call_operand.vmem [shape: f32[2,8,32], index: 0, kind: input, shape index: {}]
  %s1 = inlined_call_operand.vmem [shape: f32[2,8,32], index: 1, kind: input, shape index: {}]
  %s2 = inlined_call_operand.vmem [shape: f32[2,32,32], index: 2, kind: input, shape index: {}]
  %s3 = inlined_call_operand.vmem [shape: f32[2,1,32], index: 3, kind: input, shape index: {}]
  %s4 = inlined_call_operand.vmem [shape: f32[2,2,32], index: 4, kind: output, shape index: {}]
  %s5 = sld [smem:[#allocation0]]
  $region65: #{joint_encode.1} parent=0
    _
  %s7 = ssub.s32 1, %s5
  %s8 = scalar_select 0, %s7, %s5
  loop: start=0, step=1, limit=4
  $region2: #{joint_encode.1} parent=0 // loop_pre_header
    _
  $region3: #{joint_encode.1} parent=0 // loop_header
    %s10 = sphi 0, %s14
    %p11 = scmp.ge.s32.totalorder %s10, 4
    %s17 = sphi 0, %s36
    %s18 = sphi 0, %s32
    %s19 = sphi 0, %s28
    %s20 = sphi 0, %s17
    %s21 = sphi 0, %s18
    %s22 = sphi 0, %s19
    %s23 = sphi 0, %s20
    %s24 = sphi 0, %s21
    %s25 = sphi 0, %s22
    %s47 = sphi 0, %s49
    %s50 = sphi 0, %s47
    %s51 = sphi 0, %s50
    %s67 = sphi 0, %s51
    %s79 = sphi 0, %s81
    %s82 = sphi 0, %s79
    %s83 = sphi 0, %s82
    %s99 = sphi 0, %s83
    %s105 = sphi 0, %s107
    %s108 = sphi 0, %s105
    %s109 = sphi 0, %s108
    %s125 = sphi 0, %s109
    %s131 = sphi 0, %s133
    %s134 = sphi 0, %s131
    %s135 = sphi 0, %s134
    %s151 = sphi 0, %s135
    %s159 = sphi 0, %s161
    %s162 = sphi 0, %s159
    %s163 = sphi 0, %s162
    %s179 = sphi 0, %s163
  $region4: #{joint_encode.1} parent=0 // loop_header_branch
    %13 = sbr.rel (%p11) target = $region8
  $region5: #{joint_encode.1} parent=0 // loop_body
    %s15 = ssub.s32 %s10, 1
    %s16 = ssub.s32 %s10, 2
    %s26 = sadd.s32 1, %s19
    %p27 = scmp.ge.s32.totalorder %s26, 1
    %s28 = scalar_select %p27, 0, %s26
    %s29 = sadd.s32 1, %s18
    %s30 = scalar_select %p27, %s29, %s18
    %p31 = scmp.ge.s32.totalorder %s30, 1
    %s32 = scalar_select %p31, 0, %s30
    %s33 = sadd.s32 1, %s17
    %s34 = scalar_select %p31, %s33, %s17
    %p35 = scmp.ge.s32.totalorder %s34, 2
    %s36 = scalar_select %p35, 0, %s34
    %s37 = ssub.s32 1, %s17
    %s38 = smul.u32 %s18, %s37
    %s39 = smul.u32 %s19, %s37
    %s40 = ssub.s32 1, %s36
    %s41 = smul.u32 %s32, %s40
    %s42 = smul.u32 %s28, %s40
    %s43 = ssub.s32 %s38, %s41
    %s44 = ssub.s32 %s39, %s42
    %s45 = sor.u32 %s43, %s44
    %p46 = scmp.eq.s32.totalorder %s45, 0
    %s48 = sadd.s32 %s47, 1
    %s49 = scalar_select %p46, %s47, %s48
    %p52 = pneg %p46
    %p53 = scmp.eq.s32.totalorder %s10, 1
    %p54 = por %p52, %p53
    %p55 = scmp.ne.s32.totalorder %s47, %s50
    %p56 = scmp.eq.s32.totalorder %s10, 0
    %p57 = por %p55, %p56
    %p58 = scmp.ne.s32.totalorder %s47, %s50
    %p59 = scmp.eq.s32.totalorder %s15, 1
    %p60 = por %p58, %p59
    %p61 = scmp.ne.s32.totalorder %s50, %s51
    %p62 = scmp.eq.s32.totalorder %s15, 0
    %p63 = por %p61, %p62
    %p64 = scmp.ne.s32.totalorder %s50, %s51
    %p65 = scmp.eq.s32.totalorder %s16, 1
    %p66 = por %p64, %p65
    %p68 = scmp.ne.s32.totalorder %s51, %s67
    %p69 = scmp.eq.s32.totalorder %s16, 0
    %p70 = por %p68, %p69
    %s71 = smul.u32 %s18, %s17
    %s72 = smul.u32 %s19, %s17
    %s73 = smul.u32 %s32, %s36
    %s74 = smul.u32 %s28, %s36
    %s75 = ssub.s32 %s71, %s73
    %s76 = ssub.s32 %s72, %s74
    %s77 = sor.u32 %s75, %s76
    %p78 = scmp.eq.s32.totalorder %s77, 0
    %s80 = sadd.s32 %s79, 1
    %s81 = scalar_select %p78, %s79, %s80
    %p84 = pneg %p78
    %p85 = scmp.eq.s32.totalorder %s10, 1
    %p86 = por %p84, %p85
    %p87 = scmp.ne.s32.totalorder %s79, %s82
    %p88 = scmp.eq.s32.totalorder %s10, 0
    %p89 = por %p87, %p88
    %p90 = scmp.ne.s32.totalorder %s79, %s82
    %p91 = scmp.eq.s32.totalorder %s15, 1
    %p92 = por %p90, %p91
    %p93 = scmp.ne.s32.totalorder %s82, %s83
    %p94 = scmp.eq.s32.totalorder %s15, 0
    %p95 = por %p93, %p94
    %p96 = scmp.ne.s32.totalorder %s82, %s83
    %p97 = scmp.eq.s32.totalorder %s16, 1
    %p98 = por %p96, %p97
    %p100 = scmp.ne.s32.totalorder %s83, %s99
    %p101 = scmp.eq.s32.totalorder %s16, 0
    %p102 = por %p100, %p101
    %s103 = ssub.s32 %s17, %s36
    %p104 = scmp.eq.s32.totalorder %s103, 0
    %s106 = sadd.s32 %s105, 1
    %s107 = scalar_select %p104, %s105, %s106
    %p110 = pneg %p104
    %p111 = scmp.eq.s32.totalorder %s10, 1
    %p112 = por %p110, %p111
    %p113 = scmp.ne.s32.totalorder %s105, %s108
    %p114 = scmp.eq.s32.totalorder %s10, 0
    %p115 = por %p113, %p114
    %p116 = scmp.ne.s32.totalorder %s105, %s108
    %p117 = scmp.eq.s32.totalorder %s15, 1
    %p118 = por %p116, %p117
    %p119 = scmp.ne.s32.totalorder %s108, %s109
    %p120 = scmp.eq.s32.totalorder %s15, 0
    %p121 = por %p119, %p120
    %p122 = scmp.ne.s32.totalorder %s108, %s109
    %p123 = scmp.eq.s32.totalorder %s16, 1
    %p124 = por %p122, %p123
    %p126 = scmp.ne.s32.totalorder %s109, %s125
    %p127 = scmp.eq.s32.totalorder %s16, 0
    %p128 = por %p126, %p127
    %s129 = ssub.s32 %s17, %s36
    %p130 = scmp.eq.s32.totalorder %s129, 0
    %s132 = sadd.s32 %s131, 1
    %s133 = scalar_select %p130, %s131, %s132
    %p136 = pneg %p130
    %p137 = scmp.eq.s32.totalorder %s10, 1
    %p138 = por %p136, %p137
    %p139 = scmp.ne.s32.totalorder %s131, %s134
    %p140 = scmp.eq.s32.totalorder %s10, 0
    %p141 = por %p139, %p140
    %p142 = scmp.ne.s32.totalorder %s131, %s134
    %p143 = scmp.eq.s32.totalorder %s15, 1
    %p144 = por %p142, %p143
    %p145 = scmp.ne.s32.totalorder %s134, %s135
    %p146 = scmp.eq.s32.totalorder %s15, 0
    %p147 = por %p145, %p146
    %p148 = scmp.ne.s32.totalorder %s134, %s135
    %p149 = scmp.eq.s32.totalorder %s16, 1
    %p150 = por %p148, %p149
    %p152 = scmp.ne.s32.totalorder %s135, %s151
    %p153 = scmp.eq.s32.totalorder %s16, 0
    %p154 = por %p152, %p153
    %s155 = ssub.s32 %s17, %s36
    %s156 = ssub.s32 %s18, %s32
    %s157 = sor.u32 %s155, %s156
    %p158 = scmp.eq.s32.totalorder %s157, 0
    %s160 = sadd.s32 %s159, 1
    %s161 = scalar_select %p158, %s159, %s160
    %p164 = pneg %p158
    %p165 = scmp.eq.s32.totalorder %s10, 1
    %p166 = por %p164, %p165
    %p167 = scmp.ne.s32.totalorder %s159, %s162
    %p168 = scmp.eq.s32.totalorder %s10, 0
    %p169 = por %p167, %p168
    %p170 = scmp.ne.s32.totalorder %s159, %s162
    %p171 = scmp.eq.s32.totalorder %s15, 1
    %p172 = por %p170, %p171
    %p173 = scmp.ne.s32.totalorder %s162, %s163
    %p174 = scmp.eq.s32.totalorder %s15, 0
    %p175 = por %p173, %p174
    %p176 = scmp.ne.s32.totalorder %s162, %s163
    %p177 = scmp.eq.s32.totalorder %s16, 1
    %p178 = por %p176, %p177
    %p180 = scmp.ne.s32.totalorder %s163, %s179
    %p181 = scmp.eq.s32.totalorder %s16, 0
    %p182 = por %p180, %p181
    %p183 = scmp.le.s32.totalorder 1, %s10
    %p184 = scmp.lt.s32.totalorder %s10, 3
    %p185 = pnand %p183, %p184
    %p186 = pneg %p185
    // Predicated region
    $region9: #{joint_encode.1} parent=5 // pred_check
      _
    $region10: #{joint_encode.1} parent=5 // pred_check_branch
      %188 = sbr.rel (%p185) target = $region12
    $region11: #{joint_encode.1} parent=5 // pred_region
      %s189 = ssub.s32 %s10, 1
      // Predicated region
      $region13: #{joint_encode.1} parent=11 // pred_check
        %p190 = pneg %p121
      $region14: #{joint_encode.1} parent=11 // pred_check_branch
        %192 = sbr.rel (%p190) target = $region16
      $region15: #{joint_encode.1} parent=11 // pred_region
        %p193 = scmp.lt.s32.totalorder %s20, 1
        %s194 = scalar_select %p193, %s20, 1
        %s195 = smul.addr %s194, 4
        %s196 = smul.addr %s195, 8
        %s197 = scalar_lea.vmem %s2, %s196
      $region16: #{joint_encode.1} parent=11 // pred_fallthru
        _
      // Predicated region
      $region17: #{joint_encode.1} parent=11 // pred_check
        %p198 = pneg %p147
      $region18: #{joint_encode.1} parent=11 // pred_check_branch
        %200 = sbr.rel (%p198) target = $region20
      $region19: #{joint_encode.1} parent=11 // pred_region
        %p201 = scmp.lt.s32.totalorder %s20, 1
        %s202 = scalar_select %p201, %s20, 1
        %s203 = scalar_lea.vmem %s3, %s202
      $region20: #{joint_encode.1} parent=11 // pred_fallthru
        _
    $region12: #{joint_encode.1} parent=5 // pred_fallthru
      _
    %p204 = scmp.lt.s32.totalorder %s10, 2
    // Predicated region
    $region21: #{joint_encode.1} parent=5 // pred_check
      %p205 = pneg %p204
    $region22: #{joint_encode.1} parent=5 // pred_check_branch
      %207 = sbr.rel (%p205) target = $region24
    $region23: #{joint_encode.1} parent=5 // pred_region
      // Predicated region
      $region25: #{joint_encode.1} parent=23 // pred_check
        %p208 = pneg %p57
      $region26: #{joint_encode.1} parent=23 // pred_check_branch
        %210 = sbr.rel (%p208) target = $region28
      $region27: #{joint_encode.1} parent=23 // pred_region
        %s211 = ssub.s32 1, %s17
        %s212 = smul.u32 %s18, %s211
        %s213 = smul.u32 %s19, %s211
        %s214 = smul.u32 2, %s212
        %p215 = scmp.lt.s32.totalorder %s214, 1
        %s216 = scalar_select %p215, %s214, 1
        %p217 = scmp.lt.s32.totalorder %s213, 0
        %s218 = scalar_select %p217, %s213, 0
        %s219 = sadd.s32 %s218, %s216
        %s220 = smul.addr %s219, 8
        %s221 = scalar_lea.vmem %s0, %s220
        %s222 = ssub.s32 1, %s17
        %s223 = smul.u32 %s18, %s222
        %s224 = smul.u32 %s19, %s222
        %s225 = smul.u32 2, %s223
      $region28: #{joint_encode.1} parent=23 // pred_fallthru
        _
      // Predicated region
      $region29: #{joint_encode.1} parent=23 // pred_check
        %p226 = pneg %p89
      $region30: #{joint_encode.1} parent=23 // pred_check_branch
        %228 = sbr.rel (%p226) target = $region32
      $region31: #{joint_encode.1} parent=23 // pred_region
        %s229 = smul.u32 %s18, %s17
        %s230 = smul.u32 %s19, %s17
        %s231 = smul.u32 2, %s229
        %p232 = scmp.lt.s32.totalorder %s231, 1
        %s233 = scalar_select %p232, %s231, 1
        %p234 = scmp.lt.s32.totalorder %s230, 0
        %s235 = scalar_select %p234, %s230, 0
        %s236 = sadd.s32 %s235, %s233
        %s237 = smul.addr %s236, 8
        %s238 = scalar_lea.vmem %s1, %s237
        %s239 = smul.u32 %s18, %s17
        %s240 = smul.u32 %s19, %s17
        %s241 = smul.u32 2, %s239
      $region32: #{joint_encode.1} parent=23 // pred_fallthru
        _
    $region24: #{joint_encode.1} parent=5 // pred_fallthru
      _
    %p242 = scmp.le.s32.totalorder 1, %s10
    %p243 = scmp.lt.s32.totalorder %s10, 3
    %p244 = pnand %p242, %p243
    %p245 = pneg %p244
    // Predicated region
    $region33: #{joint_encode.1} parent=5 // pred_check
      _
    $region34: #{joint_encode.1} parent=5 // pred_check_branch
      %247 = sbr.rel (%p244) target = $region36
    $region35: #{joint_encode.1} parent=5 // pred_region
      %s248 = ssub.s32 %s10, 1
      %s249 = ssub.s32 1, %s20
      %s250 = smul.u32 %s21, %s249
      %s251 = smul.u32 %s22, %s249
      %s252 = smul.u32 2, %s250
      %p253 = scmp.lt.s32.totalorder %s252, 1
      %s254 = scalar_select %p253, %s252, 1
      %p255 = scmp.lt.s32.totalorder %s251, 0
      %s256 = scalar_select %p255, %s251, 0
      %s257 = sadd.s32 %s256, %s254
      %s258 = smul.addr %s257, 8
      %s259 = scalar_lea.vmem %s0, %s258
      %p260 = pneg %p63
      %p261 = pneg %p60
      %s262 = smul.u32 %s21, %s20
      %s263 = smul.u32 %s22, %s20
      %s264 = smul.u32 2, %s262
      %p265 = scmp.lt.s32.totalorder %s264, 1
      %s266 = scalar_select %p265, %s264, 1
      %p267 = scmp.lt.s32.totalorder %s263, 0
      %s268 = scalar_select %p267, %s263, 0
      %s269 = sadd.s32 %s268, %s266
      %s270 = smul.addr %s269, 8
      %s271 = scalar_lea.vmem %s1, %s270
      %p272 = pneg %p95
      %p273 = pneg %p92
      %p274 = scmp.lt.s32.totalorder %s20, 1
      %s275 = scalar_select %p274, %s20, 1
      %s276 = smul.addr %s275, 4
      %s277 = smul.addr %s276, 8
      %s278 = scalar_lea.vmem %s2, %s277
      %p279 = pneg %p121
      %p280 = pneg %p118
      %p281 = scmp.lt.s32.totalorder %s20, 1
      %s282 = scalar_select %p281, %s20, 1
      %s283 = scalar_lea.vmem %s3, %s282
      %p284 = pneg %p147
      %p285 = pneg %p144
      %p286 = pneg %p175
      %p287 = pneg %p172
      %p288 = scmp.lt.s32.totalorder %s20, 1
      %s289 = scalar_select %p288, %s20, 1
      %p290 = scmp.lt.s32.totalorder %s21, 0
      %s291 = scalar_select %p290, %s21, 0
      %s292 = sadd.s32 %s291, %s289
      %s293 = smul.addr %s292, 2
      %s294 = scalar_lea.vmem %s4, %s293
      %s295 = ssub.s32 1, %s20
      %s296 = smul.u32 %s21, %s295
      %s297 = smul.u32 %s22, %s295
      %s298 = smul.u32 2, %s296
      %p299 = scmp.lt.s32.totalorder %s298, 1
      %s300 = scalar_select %p299, %s298, 1
      %p301 = scmp.lt.s32.totalorder %s297, 0
      %s302 = scalar_select %p301, %s297, 0
      %s303 = sadd.s32 %s302, %s300
      %s304 = smul.addr %s303, 8
      %s305 = scalar_lea.vmem %s0, %s304
      %s306 = ssub.s32 1, %s20
      %s307 = smul.u32 %s21, %s306
      %s308 = smul.u32 %s22, %s306
      %s309 = smul.u32 2, %s307
      %s310 = smul.u32 %s21, %s20
      %s311 = smul.u32 %s22, %s20
      %s312 = smul.u32 2, %s310
      %p313 = scmp.lt.s32.totalorder %s312, 1
      %s314 = scalar_select %p313, %s312, 1
      %p315 = scmp.lt.s32.totalorder %s311, 0
      %s316 = scalar_select %p315, %s311, 0
      %s317 = sadd.s32 %s316, %s314
      %s318 = smul.addr %s317, 8
      %s319 = scalar_lea.vmem %s1, %s318
      %s320 = smul.u32 %s21, %s20
      %s321 = smul.u32 %s22, %s20
      %s322 = smul.u32 2, %s320
      %p323 = scmp.lt.s32.totalorder %s20, 1
      %s324 = scalar_select %p323, %s20, 1
      %s325 = smul.addr %s324, 4
      %s326 = smul.addr %s325, 8
      %s327 = scalar_lea.vmem %s2, %s326
      %p328 = scmp.lt.s32.totalorder %s20, 1
      %s329 = scalar_select %p328, %s20, 1
      %s330 = scalar_lea.vmem %s3, %s329
      %p331 = scmp.lt.s32.totalorder %s20, 1
      %s332 = scalar_select %p331, %s20, 1
      %p333 = scmp.lt.s32.totalorder %s21, 0
      %s334 = scalar_select %p333, %s21, 0
      %s335 = sadd.s32 %s334, %s332
      %s336 = smul.addr %s335, 2
      %s337 = scalar_lea.vmem %s4, %s336
      %p338 = scmp.eq.s32.totalorder %s22, 0
      // Predicated region
      $region37: #{joint_encode.1} parent=35 // pred_check
        %p339 = pneg %p338
      $region38: #{joint_encode.1} parent=35 // pred_check_branch
        %341 = sbr.rel (%p339) target = $region40
      $region39: #{joint_encode.1} parent=35 // pred_region
        %vm342 = vcmask 254976
        %343 = vst.msk [vmem:[#allocation2] sm:$0x3] %vm342, 0.0
      $region40: #{joint_encode.1} parent=35 // pred_fallthru
        _
      %p344 = scmp.eq.s32.totalorder %s20, 0
      // Predicated region
      $region41: #{joint_encode.1} parent=35 // pred_check
        %p345 = pneg %p344
      $region42: #{joint_encode.1} parent=35 // pred_check_branch
        %347 = sbr.rel (%p345) target = $region44
      $region43: #{joint_encode.1} parent=35 // pred_region
        %v348 = vld [vmem:[%s305] sm:$0xff]
        %v349 = vld [vmem:[%s305 + $0x8] sm:$0xff]
        %v350 = vld [vmem:[#allocation2] sm:$0x3]
        %vm351 = vcmask 261120
        %v352 = vsel %vm351, %v348, 0.0
        %v353 = vrot.slane %v352, 4
        %v354 = vadd.f32 %v352, %v353
        %v355 = vrot.slane %v354, 2
        %v356 = vadd.f32 %v354, %v355
        %v357 = vrot.slane %v356, 1
        %v358 = vadd.f32 %v356, %v357
        %v359 = vsel %vm351, %v349, 0.0
        %v360 = vrot.slane %v359, 4
        %v361 = vadd.f32 %v359, %v360
        %v362 = vrot.slane %v361, 2
        %v363 = vadd.f32 %v361, %v362
        %v364 = vrot.slane %v363, 1
        %v365 = vadd.f32 %v363, %v364
        %vm368 = vcmask 1041409
        %v369 = vsel %vm368, %v365, %v358
        %v371 = vadd.f32 %v350, %v369
        %vm372 = vcmask 254976
        %373 = vst.msk [vmem:[#allocation2] sm:$0x3] %vm372, %v371
      $region44: #{joint_encode.1} parent=35 // pred_fallthru
        _
      %p374 = scmp.eq.s32.totalorder %s20, 1
      // Predicated region
      $region45: #{joint_encode.1} parent=35 // pred_check
        %p375 = pneg %p374
      $region46: #{joint_encode.1} parent=35 // pred_check_branch
        %377 = sbr.rel (%p375) target = $region48
      $region47: #{joint_encode.1} parent=35 // pred_region
        %v378 = vld [vmem:[%s319] sm:$0xff]
        %v379 = vld [vmem:[%s319 + $0x8] sm:$0xff]
        %v380 = vld [vmem:[#allocation2] sm:$0x3]
        %vm381 = vcmask 261120
        %v382 = vsel %vm381, %v378, 0.0
        %v383 = vrot.slane %v382, 4
        %v384 = vadd.f32 %v382, %v383
        %v385 = vrot.slane %v384, 2
        %v386 = vadd.f32 %v384, %v385
        %v387 = vrot.slane %v386, 1
        %v388 = vadd.f32 %v386, %v387
        %v389 = vsel %vm381, %v379, 0.0
        %v390 = vrot.slane %v389, 4
        %v391 = vadd.f32 %v389, %v390
        %v392 = vrot.slane %v391, 2
        %v393 = vadd.f32 %v391, %v392
        %v394 = vrot.slane %v393, 1
        %v395 = vadd.f32 %v393, %v394
        %vm398 = vcmask 1041409
        %v399 = vsel %vm398, %v395, %v388
        %v401 = vadd.f32 %v380, %v399
        %vm402 = vcmask 254976
        %403 = vst.msk [vmem:[#allocation2] sm:$0x3] %vm402, %v401
      $region48: #{joint_encode.1} parent=35 // pred_fallthru
        _
      // Predicated region
      $region49: #{joint_encode.1} parent=35 // pred_check
        %p404 = pneg %p338
      $region50: #{joint_encode.1} parent=35 // pred_check_branch
        %406 = sbr.rel (%p404) target = $region52
      $region51: #{joint_encode.1} parent=35 // pred_region
        %v407 = vld [vmem:[#allocation2] sm:$0x3]
        %v408 = vmul.f32 %v407, 0.125
        %v409 = vld [vmem:[%s327] sm:$0xff]
        %v410 = vld [vmem:[%s327 + $0x8] sm:$0xff]
        %v411 = vld [vmem:[%s327 + $0x10] sm:$0xff]
        %v412 = vld [vmem:[%s327 + $0x18] sm:$0xff]
        %v413 = vld [vmem:[%s330] sm:$0x1]
        %v415 = vperm.slane %v413, 0
        %vm417 = vcmask 261120
        %v419 = vsel %vm417, %v408, 0
        %421 = vmatpush.msra.mxu0 0.0
        %422 = vmatpush.msra.mxu0 0.0
        %423 = vmatpush.msra.mxu0 0.0
        %424 = vmatpush.msra.mxu0 0.0
        %425 = vmatpush.msra.mxu0 0.0
        %426 = vmatpush.msra.mxu0 0.0
        %427 = vmatpush.msra.mxu0 0.0
        %428 = vmatpush.msra.mxu0 0.0
        %429 = vmatpush.msra.mxu0 0.0
        %430 = vmatpush.msra.mxu0 0.0
        %431 = vmatpush.msra.mxu0 0.0
        %432 = vmatpush.msra.mxu0 0.0
        %433 = vmatpush.msra.mxu0 %v412
        %434 = vmatpush.msra.mxu0 %v411
        %435 = vmatpush.msra.mxu0 %v410
        %436 = vmatpush.msra.mxu0 %v409
        %437 = vmatmul.f32.gmra.mxu0 %v419
        %v438 = vpop.f32.mrf.mxu0
        %v439 = vadd.f32 %v415, %v438
        %440 = vdwg.mxu0
        %v441 = vmax.f32 %v439, 0.0
        %vm442 = vcmask 254976
        %443 = vst.msk [vmem:[%s337] sm:$0x3] %vm442, %v441
      $region52: #{joint_encode.1} parent=35 // pred_fallthru
        _
      %p444 = scmp.lt.s32.totalorder %s20, 1
      %s445 = scalar_select %p444, %s20, 1
      %p446 = scmp.lt.s32.totalorder %s21, 0
      %s447 = scalar_select %p446, %s21, 0
      %s448 = sadd.s32 %s447, %s445
      %s449 = smul.addr %s448, 2
      %s450 = scalar_lea.vmem %s4, %s449
      // Predicated region
      $region53: #{joint_encode.1} parent=35 // pred_check
        %p451 = pneg %p172
      $region54: #{joint_encode.1} parent=35 // pred_check_branch
        %453 = sbr.rel (%p451) target = $region56
      $region55: #{joint_encode.1} parent=35 // pred_region
        _
      $region56: #{joint_encode.1} parent=35 // pred_fallthru
        _
    $region36: #{joint_encode.1} parent=5 // pred_fallthru
      _
    %p454 = scmp.le.s32.totalorder 2, %s10
    // Predicated region
    $region57: #{joint_encode.1} parent=5 // pred_check
      %p455 = pneg %p454
    $region58: #{joint_encode.1} parent=5 // pred_check_branch
      %457 = sbr.rel (%p455) target = $region60
    $region59: #{joint_encode.1} parent=5 // pred_region
      %s458 = ssub.s32 %s10, 2
      // Predicated region
      $region61: #{joint_encode.1} parent=59 // pred_check
        %p459 = pneg %p178
      $region62: #{joint_encode.1} parent=59 // pred_check_branch
        %461 = sbr.rel (%p459) target = $region64
      $region63: #{joint_encode.1} parent=59 // pred_region
        %p462 = scmp.lt.s32.totalorder %s23, 1
        %s463 = scalar_select %p462, %s23, 1
        %p464 = scmp.lt.s32.totalorder %s24, 0
        %s465 = scalar_select %p464, %s24, 0
        %s466 = sadd.s32 %s465, %s463
        %s467 = smul.addr %s466, 2
        %s468 = scalar_lea.vmem %s4, %s467
      $region64: #{joint_encode.1} parent=59 // pred_fallthru
        _
    $region60: #{joint_encode.1} parent=5 // pred_fallthru
      _
  $region6: #{joint_encode.1} parent=0 // loop_footer
    %s14 = sadd.s32 1, %s10
  $region7: #{joint_encode.1} parent=0 // loop_footer_branch
    %9 = sbr.rel target = $region3
  $region8: #{joint_encode.1} parent=0 // loop_exit
    _

</llo_original>
